<compile_context>
chip_gen: v5e
topology: v5e:2x2
jax: 0.10.0
libtpu: 0.0.40
codegen_flags: <defaults>
</compile_context>

<pallas_src>
import functools

import jax
import jax.numpy as jnp
from jax.experimental import pallas as pl
from jax.experimental.pallas import tpu as pltpu


# ---------------------------------------------------------------------------
# Fused kernel: pocket encode (surrogate) + HierVAE.rsample
# ---------------------------------------------------------------------------
def joint_vae_fused_kernel(nodes_ref, pe_w_ref, pe_b_ref, rmv_w_ref, rmv_b_ref,
                           eps_ref, z_ref, stats_ref, *, beta):
    latent = z_ref.shape[1]

    # --- surrogate pocket encoder: mean-pool nodes -> Linear -> (1, H) ---
    nodes = nodes_ref[...]                                          # (N, D) f32
    inv_n = jnp.float32(1.0 / nodes_ref.shape[0])                   # static constant
    pooled = jnp.sum(nodes, axis=0, keepdims=True) * inv_n          # (1, D)
    root = jnp.dot(pooled, pe_w_ref[...],
                   preferred_element_type=jnp.float32) + pe_b_ref[...]   # (1, H)

    # --- fused mean/var projection: one (1,H) x (H,2L) matmul ---
    mv = jnp.dot(root, rmv_w_ref[...],
                 preferred_element_type=jnp.float32) + rmv_b_ref[...]    # (1, 2L)
    z_mean = mv[:, :latent]                                         # (1, L)
    z_log_var = -jnp.abs(mv[:, latent:])                            # (1, L)

    # single transcendental; reuse e (e*e == exp(z_log_var))
    e = jnp.exp(0.5 * z_log_var)                                    # (1, L)

    # KL of one latent row == sum over B identical rows / B  (HierVAE.rsample semantics)
    kl = -0.5 * jnp.sum(1.0 + z_log_var - z_mean * z_mean - e * e)
    stats_ref[0, 0] = kl
    stats_ref[0, 1] = jnp.float32(beta) * kl   # decoder loss := 0 -> total = beta*kl

    # reparameterize; broadcast the single latent row over the batch only here
    z_ref[...] = z_mean + e * eps_ref[...]                          # (B, L)


def joint_vae_forward(pocket_nodes, params, eps, beta=0.1):
    """Pallas-backed JointVAE forward (rsample path). Returns (total_loss, kl_div, z)."""
    batch, latent = eps.shape
    n_nodes, d_node = pocket_nodes.shape
    hidden = params["pe_w"].shape[1]
    assert params["rmv_w"].shape == (hidden, 2 * latent)

    in_bytes = 4 * (pocket_nodes.size + params["pe_w"].size + params["pe_b"].size
                    + params["rmv_w"].size + params["rmv_b"].size + eps.size)
    out_bytes = 4 * (batch * latent + 2)
    flops = 2 * (d_node * hidden + hidden * 2 * latent) + 12 * latent + 3 * batch * latent

    z, stats = pl.pallas_call(
        functools.partial(joint_vae_fused_kernel, beta=float(beta)),
        out_shape=(
            jax.ShapeDtypeStruct((batch, latent), jnp.float32),  # z
            jax.ShapeDtypeStruct((1, 2), jnp.float32),           # [kl, beta*kl]
        ),
        in_specs=[pl.BlockSpec(memory_space=pltpu.MemorySpace.VMEM)] * 6,
        out_specs=(
            pl.BlockSpec(memory_space=pltpu.MemorySpace.VMEM),
            pl.BlockSpec(memory_space=pltpu.MemorySpace.SMEM),
        ),
        cost_estimate=pl.CostEstimate(flops=flops, transcendentals=latent,
                                      bytes_accessed=in_bytes + out_bytes),
    )(pocket_nodes, params["pe_w"], params["pe_b"],
      params["rmv_w"], params["rmv_b"], eps)

    kl_div = stats[0, 0]
    # TODO(synk): HierMPN decoder loss not implementable here; total_loss == beta * kl_div.
    total_loss = stats[0, 1]
    return total_loss, kl_div, z   # z: one latent row per sample (mirrors reshape(1, L))


if __name__ == "__main__":
    key = jax.random.PRNGKey(0)
    k_nodes, k_pew, k_peb, k_mw, k_mb, k_vw, k_vb, k_eps = jax.random.split(key, 8)

    # small synthetic shapes consistent with the module
    N_NODES, D_NODE = 16, 16     # pocket node scalar features
    HIDDEN = 64                  # surrogate pocket-encoder output / rsample input
    LATENT = 32                  # latent size (root_vecs.reshape(1, 32))
    BATCH = 2                    # number of latent samples
    BETA = 0.1

    pocket_nodes = jax.random.normal(k_nodes, (N_NODES, D_NODE), jnp.float32)

    pe_w = 0.1 * jax.random.normal(k_pew, (D_NODE, HIDDEN), jnp.float32)
    pe_b = 0.1 * jax.random.normal(k_peb, (1, HIDDEN), jnp.float32)
    rmean_w = 0.1 * jax.random.normal(k_mw, (HIDDEN, LATENT), jnp.float32)
    rmean_b = 0.1 * jax.random.normal(k_mb, (1, LATENT), jnp.float32)
    rvar_w = 0.1 * jax.random.normal(k_vw, (HIDDEN, LATENT), jnp.float32)
    rvar_b = 0.1 * jax.random.normal(k_vb, (1, LATENT), jnp.float32)

    # concatenate mean/var projections once at init -> single fused matmul in-kernel
    params = {
        "pe_w": pe_w,
        "pe_b": pe_b,
        "rmv_w": jnp.concatenate([rmean_w, rvar_w], axis=1),   # (H, 2L)
        "rmv_b": jnp.concatenate([rmean_b, rvar_b], axis=1),   # (1, 2L)
    }
    eps = jax.random.normal(k_eps, (BATCH, LATENT), jnp.float32)

    total_loss, kl_div, z = joint_vae_forward(pocket_nodes, params, eps, beta=BETA)
    jax.block_until_ready((total_loss, kl_div, z))

    # plain-JAX reference (same semantics as the original two-kernel version)
    pooled = jnp.mean(pocket_nodes, axis=0, keepdims=True)
    rv = pooled @ pe_w + pe_b                                  # (1, H), identical per row
    zm = rv @ rmean_w + rmean_b                                # (1, L)
    zlv = -jnp.abs(rv @ rvar_w + rvar_b)                       # (1, L)
    # KL summed over B identical rows then divided by B == single-row KL
    kl_ref = -0.5 * jnp.sum(1.0 + zlv - zm * zm - jnp.exp(zlv))
    z_ref = zm + jnp.exp(0.5 * zlv) * eps                      # broadcasts to (B, L)
    total_ref = BETA * kl_ref

    assert jnp.allclose(kl_div, kl_ref, rtol=1e-5, atol=1e-5)
    assert jnp.allclose(total_loss, total_ref, rtol=1e-5, atol=1e-5)
    assert jnp.allclose(z, z_ref, rtol=1e-5, atol=1e-5)

    print("KERNEL_OK")
</pallas_src>

<mosaic_0001>
module attributes {stable_mosaic.version = 11 : i64} {
  func.func @joint_vae_fused_kernel(%arg0: memref<16x16xf32, #tpu.memory_space<vmem>>, %arg1: memref<16x64xf32, #tpu.memory_space<vmem>>, %arg2: memref<1x64xf32, #tpu.memory_space<vmem>>, %arg3: memref<64x64xf32, #tpu.memory_space<vmem>>, %arg4: memref<1x64xf32, #tpu.memory_space<vmem>>, %arg5: memref<2x32xf32, #tpu.memory_space<vmem>>, %arg6: memref<2x32xf32, #tpu.memory_space<vmem>>, %arg7: memref<1x2xf32, #tpu.memory_space<smem>>) attributes {dimension_semantics = [], scalar_prefetch = 0 : i64, scratch_operands = 0 : i64, tpu.core_type = #tpu.core_type<tc>} {
    %c0 = arith.constant 0 : index
    %c0_0 = arith.constant 0 : index
    %0 = vector.load %arg0[%c0, %c0_0] : memref<16x16xf32, #tpu.memory_space<vmem>>, vector<16x16xf32>
    %cst = arith.constant dense<0.000000e+00> : vector<16xf32>
    %1 = vector.multi_reduction <add>, %0, %cst [0] : vector<16x16xf32> to vector<16xf32>
    %2 = vector.shape_cast %1 : vector<16xf32> to vector<1x16xf32>
    %cst_1 = arith.constant 6.250000e-02 : f32
    %3 = vector.broadcast %cst_1 : f32 to vector<1x16xf32>
    %4 = arith.mulf %2, %3 : vector<1x16xf32>
    %c0_2 = arith.constant 0 : index
    %c0_3 = arith.constant 0 : index
    %5 = vector.load %arg1[%c0_2, %c0_3] : memref<16x64xf32, #tpu.memory_space<vmem>>, vector<16x64xf32>
    %cst_4 = arith.constant dense<0.000000e+00> : vector<1x64xf32>
    %6 = tpu.matmul %4, %5, %cst_4 {dimension_numbers = #tpu.dot_dimension_numbers<[1], [0], [0], [1], [0, 0, 1, 1], [], []>} : vector<1x16xf32>, vector<16x64xf32>, vector<1x64xf32> -> vector<1x64xf32>
    %c0_5 = arith.constant 0 : index
    %c0_6 = arith.constant 0 : index
    %7 = vector.load %arg2[%c0_5, %c0_6] : memref<1x64xf32, #tpu.memory_space<vmem>>, vector<1x64xf32>
    %8 = arith.addf %6, %7 : vector<1x64xf32>
    %c0_7 = arith.constant 0 : index
    %c0_8 = arith.constant 0 : index
    %9 = vector.load %arg3[%c0_7, %c0_8] : memref<64x64xf32, #tpu.memory_space<vmem>>, vector<64x64xf32>
    %cst_9 = arith.constant dense<0.000000e+00> : vector<1x64xf32>
    %10 = tpu.matmul %8, %9, %cst_9 {dimension_numbers = #tpu.dot_dimension_numbers<[1], [0], [0], [1], [0, 0, 1, 1], [], []>} : vector<1x64xf32>, vector<64x64xf32>, vector<1x64xf32> -> vector<1x64xf32>
    %c0_10 = arith.constant 0 : index
    %c0_11 = arith.constant 0 : index
    %11 = vector.load %arg4[%c0_10, %c0_11] : memref<1x64xf32, #tpu.memory_space<vmem>>, vector<1x64xf32>
    %12 = arith.addf %10, %11 : vector<1x64xf32>
    %13 = vector.extract_strided_slice %12 {offsets = [0, 0], sizes = [1, 32], strides = [1, 1]} : vector<1x64xf32> to vector<1x32xf32>
    %14 = vector.extract_strided_slice %12 {offsets = [0, 32], sizes = [1, 32], strides = [1, 1]} : vector<1x64xf32> to vector<1x32xf32>
    %15 = math.absf %14 : vector<1x32xf32>
    %cst_12 = arith.constant 0.000000e+00 : f32
    %16 = vector.broadcast %cst_12 : f32 to vector<1x32xf32>
    %17 = arith.subf %16, %15 : vector<1x32xf32>
    %cst_13 = arith.constant 5.000000e-01 : f32
    %18 = vector.broadcast %cst_13 : f32 to vector<1x32xf32>
    %19 = arith.mulf %18, %17 : vector<1x32xf32>
    %20 = math.exp %19 : vector<1x32xf32>
    %cst_14 = arith.constant 1.000000e+00 : f32
    %21 = vector.broadcast %cst_14 : f32 to vector<1x32xf32>
    %22 = arith.addf %21, %17 : vector<1x32xf32>
    %23 = arith.mulf %13, %13 : vector<1x32xf32>
    %24 = arith.subf %22, %23 : vector<1x32xf32>
    %25 = arith.mulf %20, %20 : vector<1x32xf32>
    %26 = arith.subf %24, %25 : vector<1x32xf32>
    %27 = vector.shape_cast %26 : vector<1x32xf32> to vector<1x1x32xf32>
    %cst_15 = arith.constant dense<0.000000e+00> : vector<1xf32>
    %28 = vector.multi_reduction <add>, %27, %cst_15 [1, 2] : vector<1x1x32xf32> to vector<1xf32>
    %29 = vector.shape_cast %28 : vector<1xf32> to vector<1x1x1xf32>
    %30 = vector.extract %29[0, 0, 0] : f32 from vector<1x1x1xf32>
    %cst_16 = arith.constant -5.000000e-01 : f32
    %31 = arith.mulf %cst_16, %30 : f32
    %c0_17 = arith.constant 0 : index
    %c0_18 = arith.constant 0 : index
    %32 = memref.load %arg7[%c0_17, %c0_18] : memref<1x2xf32, #tpu.memory_space<smem>>
    memref.store %31, %arg7[%c0_17, %c0_18] : memref<1x2xf32, #tpu.memory_space<smem>>
    %cst_19 = arith.constant 1.000000e-01 : f32
    %33 = arith.mulf %cst_19, %31 : f32
    %c0_20 = arith.constant 0 : index
    %c1 = arith.constant 1 : index
    %34 = memref.load %arg7[%c0_20, %c1] : memref<1x2xf32, #tpu.memory_space<smem>>
    memref.store %33, %arg7[%c0_20, %c1] : memref<1x2xf32, #tpu.memory_space<smem>>
    %c0_21 = arith.constant 0 : index
    %c0_22 = arith.constant 0 : index
    %35 = vector.load %arg5[%c0_21, %c0_22] : memref<2x32xf32, #tpu.memory_space<vmem>>, vector<2x32xf32>
    %36 = vector.broadcast %20 : vector<1x32xf32> to vector<2x32xf32>
    %37 = arith.mulf %36, %35 : vector<2x32xf32>
    %38 = vector.broadcast %13 : vector<1x32xf32> to vector<2x32xf32>
    %39 = arith.addf %38, %37 : vector<2x32xf32>
    %c0_23 = arith.constant 0 : index
    %c0_24 = arith.constant 0 : index
    %40 = vector.load %arg6[%c0_23, %c0_24] : memref<2x32xf32, #tpu.memory_space<vmem>>, vector<2x32xf32>
    tpu.vector_store %arg6[%c0_23, %c0_24], %39 {strides = array<i32>} : memref<2x32xf32, #tpu.memory_space<vmem>>, vector<2x32xf32>,
    return
  }
}

</mosaic_0001>

<llo_original>
// kernel: tpu_custom_call.1
$region0: #{tpu_custom_call.1}
  #allocation0 [shape = 'u32[]', space=smem, size = 0x4, offset = 0x4, fixed_abs, tag = 'smem constant byte address 0x4 - core index']
  #allocation1 [shape = 'u32[72,128]{1,0:T(1,128)}', space=vmem, size = 0x9000, scoped, tag = 'internal scratch']
  %s0 = inlined_call_operand.hbm [shape: f32[16,16], index: 0, kind: input, shape index: {}]
  %s1 = inlined_call_operand.hbm [shape: f32[16,64], index: 1, kind: input, shape index: {}]
  %s2 = inlined_call_operand.vmem [shape: f32[1,64], index: 2, kind: input, shape index: {}]
  %s3 = inlined_call_operand.hbm [shape: f32[64,64], index: 3, kind: input, shape index: {}]
  %s4 = inlined_call_operand.hbm [shape: f32[1,64], index: 4, kind: input, shape index: {}]
  %s5 = inlined_call_operand.vmem [shape: f32[2,32], index: 5, kind: input, shape index: {}]
  %s6 = inlined_call_operand.hbm [shape: f32[2,32], index: 6, kind: output, shape index: {0}]
  %s7 = inlined_call_operand.hbm [shape: f32[1,2], index: 7, kind: output, shape index: {1}]
  %8 = xla_tuple %s6, %s7
  %s9 = sld [smem:[#allocation0]]
  $region58: #{tpu_custom_call.1} parent=0
    _
  %s11 = ssub.s32 1, %s9
  %s12 = scalar_select 0, %s11, %s9
  $region1: #{tpu_custom_call.1} parent=0
    #allocation2 [shape = 'u8[8192]{0}', space=vmem, size = 0x2000, scoped, tag = 'input window, operand 0, single buffered']
    #allocation3 [shape = 's32[1]{0}', space=sflag, size = 0x4, scoped, tag = 'scoped memory for tpu_custom_call.1']
    #allocation4 [shape = 's32[1]{0}', space=sflag, size = 0x4, scoped, tag = 'scoped memory for tpu_custom_call.1']
    #allocation5 [shape = 's32[1]{0}', space=sflag, size = 0x4, scoped, tag = 'scoped memory for tpu_custom_call.1']
    #allocation6 [shape = 'u8[8192]{0}', space=vmem, size = 0x2000, scoped, tag = 'input window, operand 1, single buffered']
    #allocation7 [shape = 's32[1]{0}', space=sflag, size = 0x4, scoped, tag = 'scoped memory for tpu_custom_call.1']
    #allocation8 [shape = 'u8[32768]{0}', space=vmem, size = 0x8000, scoped, tag = 'input window, operand 3, single buffered']
    #allocation9 [shape = 'u8[512]{0}', space=vmem, size = 0x400, scoped, tag = 'input window, operand 4, single buffered']
    #allocation10 [shape = 's32[1]{0}', space=sflag, size = 0x4, scoped, tag = 'scoped memory for tpu_custom_call.1']
    #allocation11 [shape = 'u8[1024]{0}', space=vmem, size = 0x400, scoped, tag = 'output window, operand 0, single buffered']
    #allocation12 [shape = 'u8[512]{0}', space=smem, size = 0x200, scoped, tag = 'output window, operand 1, single buffered']
    %13 = vsyncpa [#allocation3], 0
    %14 = vsyncpa [#allocation7], 0
    %15 = vsyncpa [#allocation10], 0
    %16 = vsyncpa [#allocation4], 0
    %17 = vsyncpa [#allocation5], 0
    // Predicated region
    $region2: #{tpu_custom_call.1} parent=1 // pred_check
      _
    $region3: #{tpu_custom_call.1} parent=1 // pred_check_branch
      %19 = sbr.rel (0) target = $region5
    $region4: #{tpu_custom_call.1} parent=1 // pred_region
      %21 = vsyncadd [#allocation3], 0
      %s22 = sshll.u32 %s0, 4
      %s23 = int_to_ptr.hbm [resolvable:$true] %s22
      %s24 = sshll.u32 [#allocation2], 4
      %s25 = int_to_ptr.vmem [resolvable:$true] %s24
      %30 = dma.hbm_to_vmem [thread:$0]  %s23, 256, %s25, [#allocation3], 128, 128, 8
    $region5: #{tpu_custom_call.1} parent=1 // pred_fallthru
      _
    // Predicated region
    $region6: #{tpu_custom_call.1} parent=1 // pred_check
      _
    $region7: #{tpu_custom_call.1} parent=1 // pred_check_branch
      %32 = sbr.rel (0) target = $region9
    $region8: #{tpu_custom_call.1} parent=1 // pred_region
      %34 = vsyncadd [#allocation7], 0
      %s35 = sshll.u32 %s1, 4
      %s36 = int_to_ptr.hbm [resolvable:$true] %s35
      %s37 = sshll.u32 [#allocation6], 4
      %s38 = int_to_ptr.vmem [resolvable:$true] %s37
      %43 = dma.hbm_to_vmem [thread:$0]  %s36, 256, %s38, [#allocation7], 128, 128, 8
    $region9: #{tpu_custom_call.1} parent=1 // pred_fallthru
      _
    // Predicated region
    $region10: #{tpu_custom_call.1} parent=1 // pred_check
      _
    $region11: #{tpu_custom_call.1} parent=1 // pred_check_branch
      %45 = sbr.rel (0) target = $region13
    $region12: #{tpu_custom_call.1} parent=1 // pred_region
      _
    $region13: #{tpu_custom_call.1} parent=1 // pred_fallthru
      _
    // Predicated region
    $region14: #{tpu_custom_call.1} parent=1 // pred_check
      _
    $region15: #{tpu_custom_call.1} parent=1 // pred_check_branch
      %47 = sbr.rel (0) target = $region17
    $region16: #{tpu_custom_call.1} parent=1 // pred_region
      %49 = vsyncadd [#allocation7], 0
      %s50 = sshll.u32 %s3, 4
      %s51 = int_to_ptr.hbm [resolvable:$true] %s50
      %s52 = sshll.u32 [#allocation8], 4
      %s53 = int_to_ptr.vmem [resolvable:$true] %s52
      %58 = dma.hbm_to_vmem [thread:$0]  %s51, 1024, %s53, [#allocation7], 128, 128, 8
    $region17: #{tpu_custom_call.1} parent=1 // pred_fallthru
      _
    // Predicated region
    $region18: #{tpu_custom_call.1} parent=1 // pred_check
      _
    $region19: #{tpu_custom_call.1} parent=1 // pred_check_branch
      %60 = sbr.rel (0) target = $region21
    $region20: #{tpu_custom_call.1} parent=1 // pred_region
      %62 = vsyncadd [#allocation10], 0
      %s64 = sshll.u32 %s4, 4
      %s65 = int_to_ptr.hbm [resolvable:$true] %s64
      %s66 = sshll.u32 [#allocation9], 4
      %s67 = int_to_ptr.vmem [resolvable:$true] %s66
      %69 = dma.hbm_to_vmem [thread:$0]  %s65, 16, %s67, [#allocation10]
    $region21: #{tpu_custom_call.1} parent=1 // pred_fallthru
      _
    // Predicated region
    $region22: #{tpu_custom_call.1} parent=1 // pred_check
      _
    $region23: #{tpu_custom_call.1} parent=1 // pred_check_branch
      %71 = sbr.rel (0) target = $region25
    $region24: #{tpu_custom_call.1} parent=1 // pred_region
      _
    $region25: #{tpu_custom_call.1} parent=1 // pred_fallthru
      _
    // Predicated region
    $region26: #{tpu_custom_call.1} parent=1 // pred_check
      _
    $region27: #{tpu_custom_call.1} parent=1 // pred_check_branch
      %73 = sbr.rel (0) target = $region29
    $region28: #{tpu_custom_call.1} parent=1 // pred_region
      %75 = dma.done [#allocation3], 256
    $region29: #{tpu_custom_call.1} parent=1 // pred_fallthru
      _
    // Predicated region
    $region30: #{tpu_custom_call.1} parent=1 // pred_check
      _
    $region31: #{tpu_custom_call.1} parent=1 // pred_check_branch
      %77 = sbr.rel (0) target = $region33
    $region32: #{tpu_custom_call.1} parent=1 // pred_region
      %79 = dma.done [#allocation7], 256
    $region33: #{tpu_custom_call.1} parent=1 // pred_fallthru
      _
    // Predicated region
    $region34: #{tpu_custom_call.1} parent=1 // pred_check
      _
    $region35: #{tpu_custom_call.1} parent=1 // pred_check_branch
      %81 = sbr.rel (0) target = $region37
    $region36: #{tpu_custom_call.1} parent=1 // pred_region
      %83 = dma.done [#allocation7], 1024
    $region37: #{tpu_custom_call.1} parent=1 // pred_fallthru
      _
    // Predicated region
    $region38: #{tpu_custom_call.1} parent=1 // pred_check
      _
    $region39: #{tpu_custom_call.1} parent=1 // pred_check_branch
      %85 = sbr.rel (0) target = $region41
    $region40: #{tpu_custom_call.1} parent=1 // pred_region
      %87 = dma.done [#allocation10], 16
    $region41: #{tpu_custom_call.1} parent=1 // pred_fallthru
      _
    %v88 = vld [vmem:[#allocation2] sm:$0xff]
    %v89 = vld [vmem:[#allocation2 + $0x8] sm:$0xff]
    %vm90 = vcmask 130048
    %v91 = vsel %vm90, %v88, 0.0
    %v92 = vsel %vm90, %v89, 0.0
    %v93 = vadd.f32 %v91, %v92
    %v94 = vrot.slane %v93, 4
    %v95 = vadd.f32 %v93, %v94
    %v96 = vrot.slane %v95, 2
    %v97 = vadd.f32 %v95, %v96
    %v98 = vrot.slane %v97, 1
    %v99 = vadd.f32 %v97, %v98
    %v100 = vmul.f32 %v99, 0.0625
    %v101 = vld [vmem:[#allocation6] sm:$0xff]
    %v102 = vld [vmem:[#allocation6 + $0x8] sm:$0xff]
    %v103 = vld [vmem:[%s2] sm:$0x1]
    %v105 = vsel %vm90, %v100, 0
    %107 = vmatpush.msra.mxu0 0.0
    %108 = vmatpush.msra.mxu0 0.0
    %109 = vmatpush.msra.mxu0 0.0
    %110 = vmatpush.msra.mxu0 0.0
    %111 = vmatpush.msra.mxu0 0.0
    %112 = vmatpush.msra.mxu0 0.0
    %113 = vmatpush.msra.mxu0 0.0
    %114 = vmatpush.msra.mxu0 0.0
    %115 = vmatpush.msra.mxu0 0.0
    %116 = vmatpush.msra.mxu0 0.0
    %117 = vmatpush.msra.mxu0 0.0
    %118 = vmatpush.msra.mxu0 0.0
    %119 = vmatpush.msra.mxu0 0.0
    %120 = vmatpush.msra.mxu0 0.0
    %121 = vmatpush.msra.mxu0 %v102
    %122 = vmatpush.msra.mxu0 %v101
    %123 = vmatmul.f32.gmra.mxu0 %v105
    %v124 = vpop.f32.mrf.mxu0
    %v125 = vadd.f32 %v103, %v124
    %126 = vdwg.mxu0
    %v127 = vld [vmem:[#allocation8] sm:$0xff]
    %v128 = vld [vmem:[#allocation8 + $0x8] sm:$0xff]
    %v129 = vld [vmem:[#allocation8 + $0x10] sm:$0xff]
    %v130 = vld [vmem:[#allocation8 + $0x18] sm:$0xff]
    %v131 = vld [vmem:[#allocation8 + $0x20] sm:$0xff]
    %v132 = vld [vmem:[#allocation8 + $0x28] sm:$0xff]
    %v133 = vld [vmem:[#allocation8 + $0x30] sm:$0xff]
    %v134 = vld [vmem:[#allocation8 + $0x38] sm:$0xff]
    %v135 = vld [vmem:[#allocation9] sm:$0x1]
    %vm136 = vcmask 523264
    %v138 = vsel %vm136, %v125, 0
    %140 = vmatpush.msra.mxu0 0.0
    %141 = vmatpush.msra.mxu0 0.0
    %142 = vmatpush.msra.mxu0 0.0
    %143 = vmatpush.msra.mxu0 0.0
    %144 = vmatpush.msra.mxu0 0.0
    %145 = vmatpush.msra.mxu0 0.0
    %146 = vmatpush.msra.mxu0 0.0
    %147 = vmatpush.msra.mxu0 0.0
    %148 = vmatpush.msra.mxu0 %v134
    %149 = vmatpush.msra.mxu0 %v133
    %150 = vmatpush.msra.mxu0 %v132
    %151 = vmatpush.msra.mxu0 %v131
    %152 = vmatpush.msra.mxu0 %v130
    %153 = vmatpush.msra.mxu0 %v129
    %154 = vmatpush.msra.mxu0 %v128
    %155 = vmatpush.msra.mxu0 %v127
    %156 = vmatmul.f32.gmra.mxu0 %v138
    %v157 = vpop.f32.mrf.mxu0
    %v158 = vadd.f32 %v135, %v157
    %159 = vdwg.mxu0
    %v160 = vand.u32 2147483647, %v158
    %v161 = vsub.f32 0.0, %v160
    %v162 = vmul.f32 %v161, 0.5
    %v163 = vmul.f32 %v162, 1.442695
    %v164 = vpow.pop %v163
    %v165 = vadd.f32 %v161, 1.0
    %v166 = vmul.f32 %v158, %v158
    %168 = vrot.lane.b32.xlu0 %v166, 32
    %v169 = vpop.permute.xlu0 %168
    %v171 = vsub.f32 %v165, %v169
    %v172 = vmul.f32 %v164, %v164
    %v173 = vsub.f32 %v171, %v172
    %175 = vrot.lane.b32.xlu0 %v173, 96
    %v176 = vpop.permute.xlu0 %175
    %vm178 = vcmask 253952
    %v179 = vsel %vm178, %v176, 0.0
    %180 = vadd.xlane.f32.xlu0 %v179
    %v181 = vpop.xlane.xlu0 %180
    %v182 = vrot.slane %v181, 4
    %v183 = vadd.f32 %v181, %v182
    %v184 = vrot.slane %v183, 2
    %v185 = vadd.f32 %v183, %v184
    %v186 = vrot.slane %v185, 1
    %v187 = vadd.f32 %v185, %v186
    %s188 = vtos %v187
    %s189 = smul.f32 %s188, -0.5
    %s190 = scalar_lea.smem [#allocation12], 0
    %191 = sst [smem:[%s190]] %s189
    %s192 = smul.f32 %s189, 0.1
    %s193 = scalar_lea.smem [#allocation12], 1
    %194 = sst [smem:[%s193]] %s192
    %v195 = vld [vmem:[%s5] sm:$0x3]
    %v196 = vperm.slane %v164, 0
    %198 = vrot.lane.b32.xlu0 %v195, 32
    %v199 = vpop.permute.xlu0 %198
    %v201 = vmul.f32 %v196, %v199
    %v202 = vperm.slane %v158, 0
    %204 = vrot.lane.b32.xlu0 %v201, 96
    %v205 = vpop.permute.xlu0 %204
    %v207 = vadd.f32 %v202, %v205
    %vm208 = vcmask 254976
    %209 = vst.msk [vmem:[#allocation11] sm:$0x3] %vm208, %v207
    // Predicated region
    $region42: #{tpu_custom_call.1} parent=1 // pred_check
      _
    $region43: #{tpu_custom_call.1} parent=1 // pred_check_branch
      %211 = sbr.rel (0) target = $region45
    $region44: #{tpu_custom_call.1} parent=1 // pred_region
      %213 = vsyncadd [#allocation4], 0
      %s215 = sshll.u32 [#allocation11], 4
      %s216 = int_to_ptr.vmem [resolvable:$true] %s215
      %s217 = sshll.u32 %s6, 4
      %s218 = int_to_ptr.hbm [resolvable:$true] %s217
      %220 = dma.vmem_to_hbm [thread:$0]  %s216, 32, %s218, [#allocation4]
    $region45: #{tpu_custom_call.1} parent=1 // pred_fallthru
      _
    // Predicated region
    $region46: #{tpu_custom_call.1} parent=1 // pred_check
      _
    $region47: #{tpu_custom_call.1} parent=1 // pred_check_branch
      %222 = sbr.rel (0) target = $region49
    $region48: #{tpu_custom_call.1} parent=1 // pred_region
      %224 = vsyncadd [#allocation5], 0
      %s226 = sshll.u32 %s7, 4
      %s227 = int_to_ptr.hbm [resolvable:$true] %s226
      %229 = dma.smem_to_hbm [#allocation12], 16, %s227, [#allocation5]
    $region49: #{tpu_custom_call.1} parent=1 // pred_fallthru
      _
    // Predicated region
    $region50: #{tpu_custom_call.1} parent=1 // pred_check
      _
    $region51: #{tpu_custom_call.1} parent=1 // pred_check_branch
      %231 = sbr.rel (0) target = $region53
    $region52: #{tpu_custom_call.1} parent=1 // pred_region
      %233 = dma.done [#allocation4], 32
    $region53: #{tpu_custom_call.1} parent=1 // pred_fallthru
      _
    // Predicated region
    $region54: #{tpu_custom_call.1} parent=1 // pred_check
      _
    $region55: #{tpu_custom_call.1} parent=1 // pred_check_branch
      %235 = sbr.rel (0) target = $region57
    $region56: #{tpu_custom_call.1} parent=1 // pred_region
      %237 = dma.done [#allocation5], 16
    $region57: #{tpu_custom_call.1} parent=1 // pred_fallthru
      _
    %238 = sfence
    %239 = vsyncpa [#allocation3], 1
    %240 = vsyncpa [#allocation7], 1
    %241 = vsyncpa [#allocation10], 1
    %242 = vsyncpa [#allocation4], 1
    %243 = vsyncpa [#allocation5], 1

</llo_original>
